<compile_context>
chip_gen: v7x
topology: tpu7x:2x2x1
jax: 0.10.0
libtpu: 0.0.40
codegen_flags: <defaults>
</compile_context>

<pallas_src>
import functools
import math

import jax
import jax.numpy as jnp
from jax.experimental import pallas as pl
from jax.experimental.pallas import tpu as pltpu


def _layernorm(h, w, eps=1e-5):
    # nn.LayerNorm(d_model, bias=False): biased variance over last dim, scale only.
    mu = jnp.mean(h, axis=-1, keepdims=True)
    var = jnp.mean((h - mu) ** 2, axis=-1, keepdims=True)
    return (h - mu) * jax.lax.rsqrt(var + eps) * w


# ----------------------------------------------------------------------------------
# Kernel A: LN1 + QKV projection, once per token.  Outputs bf16 Q/K/V in (B,H,S,hd).
# ----------------------------------------------------------------------------------
def _qkv_kernel(x_ref, ln1w_ref, wqkv_ref, q_ref, k_ref, v_ref,
                *, num_heads: int, head_dim: int, d_model: int):
    f32, bf16 = jnp.float32, jnp.bfloat16
    h1 = _layernorm(x_ref[...].astype(f32), ln1w_ref[...]).astype(bf16)
    # One full-width matmul (best MXU utilization); per-head column split afterwards.
    qkv = jnp.dot(h1, wqkv_ref[...], preferred_element_type=f32)   # (tq, 3*D)
    D, hd = d_model, head_dim
    for h in range(num_heads):                                     # static unroll
        q_ref[h] = qkv[:, h * hd:(h + 1) * hd].astype(bf16)        # Wq pre-scaled
        k_ref[h] = qkv[:, D + h * hd:D + (h + 1) * hd].astype(bf16)
        v_ref[h] = qkv[:, 2 * D + h * hd:2 * D + (h + 1) * hd].astype(bf16)


# ----------------------------------------------------------------------------------
# Kernel B: flash attention over lower-triangular (qi, ki) tile pairs (scalar
# prefetch tables), all heads per step, + output projection + residual + bias.
# ----------------------------------------------------------------------------------
def _attn_kernel(qi_tab, ki_tab, q_ref, k_ref, v_ref, x_ref, wproj_ref, bproj_ref,
                 o_ref, m_scr, l_scr, acc_scr,
                 *, num_heads: int, head_dim: int, tq: int, tk: int):
    f32, bf16 = jnp.float32, jnp.bfloat16
    p = pl.program_id(1)
    qi = qi_tab[p]
    ki = ki_tab[p]
    is_first = ki == 0          # first kv tile of this query tile's segment
    is_last = ki == qi          # diagonal tile (tq == tk) -> last + only masked tile

    @pl.when(is_first)
    def _():
        m_scr[...] = jnp.full((num_heads, tq, 1), -jnp.inf, f32)
        l_scr[...] = jnp.zeros((num_heads, tq, 1), f32)
        acc_scr[...] = jnp.zeros((num_heads, tq, head_dim), f32)

    q = q_ref[...]              # (H, tq, hd) bf16, already scaled by 1/sqrt(hd)
    k = k_ref[...]              # (H, tk, hd) bf16
    v = v_ref[...]              # (H, tk, hd) bf16
    s = jnp.einsum("hqd,hkd->hqk", q, k, preferred_element_type=f32)   # (H, tq, tk)

    def flash_update(scores):
        m_prev = m_scr[...]
        m_new = jnp.maximum(m_prev, scores.max(axis=-1, keepdims=True))
        alpha = jnp.exp(m_prev - m_new)
        probs = jnp.exp(scores - m_new)
        l_scr[...] = alpha * l_scr[...] + probs.sum(axis=-1, keepdims=True)
        acc_scr[...] = alpha * acc_scr[...] + jnp.einsum(
            "hqk,hkd->hqd", probs.astype(bf16), v, preferred_element_type=f32)
        m_scr[...] = m_new

    @pl.when(jnp.logical_not(is_last))
    def _():
        flash_update(s)         # off-diagonal valid tiles: fully unmasked

    @pl.when(is_last)
    def _():
        # Diagonal tile: causal mask from a (tq,1) vs (1,tk) iota compare.
        row = jax.lax.broadcasted_iota(jnp.int32, (tq, 1), 0)
        col = jax.lax.broadcasted_iota(jnp.int32, (1, tk), 1)
        mask = (row >= col)[None]                                  # (1, tq, tk)
        flash_update(jnp.where(mask, s, -1e30))

        # Epilogue: normalize, fold each head into the output projection, residual.
        inv_l = pl.reciprocal(l_scr[...], approx=True)             # (H, tq, 1)
        attn = (acc_scr[...] * inv_l).astype(bf16)                 # (H, tq, hd)
        out = x_ref[...].astype(f32) + bproj_ref[...].astype(f32)  # residual + bias
        # TODO(synk): for head_dim < 128 pack two heads per matmul to widen the MXU
        # contraction; left as per-head dots (runs once per q-tile, not per kv step).
        for h in range(num_heads):                                 # static unroll
            out = out + jnp.dot(attn[h], wproj_ref[h], preferred_element_type=f32)
        o_ref[...] = out.astype(o_ref.dtype)


# ----------------------------------------------------------------------------------
# Kernel C: LN2 -> MLP(GELU) -> residual, with the d_ff dimension tiled (reduction).
# ----------------------------------------------------------------------------------
def _mlp_kernel(x_ref, ln2w_ref, w1_ref, w2_ref, o_ref, h2_scr, acc_scr):
    f32, bf16 = jnp.float32, jnp.bfloat16
    di = pl.program_id(2)

    @pl.when(di == 0)
    def _():
        h2_scr[...] = _layernorm(x_ref[...].astype(f32), ln2w_ref[...]).astype(bf16)
        acc_scr[...] = jnp.zeros(acc_scr.shape, f32)

    ff = jnp.dot(h2_scr[...], w1_ref[...], preferred_element_type=f32)
    ff = jax.nn.gelu(ff, approximate=False)        # exact erf, matches nn.GELU()
    acc_scr[...] += jnp.dot(ff.astype(bf16), w2_ref[...], preferred_element_type=f32)

    @pl.when(di == pl.num_programs(2) - 1)
    def _():
        o_ref[...] = (x_ref[...].astype(f32) + acc_scr[...]).astype(o_ref.dtype)


# ----------------------------------------------------------------------------------
# Wrapper
# ----------------------------------------------------------------------------------
def _pick_tile(s, target):
    # Largest multiple of 8 that divides s and is <= target; fall back to full s.
    best = s
    for t in range(8, min(target, s) + 1, 8):
        if s % t == 0:
            best = t
    return best
    # TODO(synk): pad S to a multiple of the tile instead of falling back to full-S.


def _vmem_limit_bytes(default_cap=64 * 1024 * 1024):
    cap = default_cap
    try:
        info = pltpu.get_tpu_info()
        c = getattr(info, "vmem_capacity_bytes", None)
        if c:
            cap = int(c)
    except Exception:
        pass
    return int(cap * 0.8)


def optimized_transformer_block(x, params, *, num_heads: int,
                                tile_q: int = 256, tile_dff: int = 512):
    """x: (B, S, D) float32. params: dict of pre-transposed weights (see __main__)."""
    B, S, D = x.shape
    assert D % num_heads == 0
    hd = D // num_heads
    dff = params["w1"].shape[1]

    tq = _pick_tile(S, tile_q)
    tk = tq
    assert S % tq == 0
    nq = S // tq

    tdff = min(tile_dff, dff)
    if dff % tdff != 0 or (tdff % 128 != 0 and tdff != dff):
        tdff = dff
    ndff = dff // tdff

    f32, bf16 = jnp.float32, jnp.bfloat16

    # ---- host-side weight prep (pre-transposed; fold 1/sqrt(hd) into Wq) ----
    scale = 1.0 / math.sqrt(hd)
    wqkv = params["wqkv"].astype(f32)
    wqkv = jnp.concatenate([wqkv[:, :D] * scale, wqkv[:, D:]], axis=1).astype(bf16)
    wproj_h = params["wproj"].reshape(num_heads, hd, D).astype(bf16)   # (H, hd, D)
    w1 = params["w1"].astype(bf16)
    w2 = params["w2"].astype(bf16)
    ln1w = params["ln1_w"].astype(f32)
    ln2w = params["ln2_w"].astype(f32)
    bproj = params["bproj"].astype(f32)

    vmem_limit = _vmem_limit_bytes()

    def cp(sem):
        return pltpu.CompilerParams(dimension_semantics=sem,
                                    vmem_limit_bytes=vmem_limit)

    # ---- Kernel A: LN1 + QKV projection (once per token) ----
    q_hsd, k_hsd, v_hsd = pl.pallas_call(
        functools.partial(_qkv_kernel, num_heads=num_heads, head_dim=hd, d_model=D),
        out_shape=tuple(jax.ShapeDtypeStruct((B, num_heads, S, hd), bf16)
                        for _ in range(3)),
        grid_spec=pltpu.PrefetchScalarGridSpec(
            num_scalar_prefetch=0,
            grid=(B, nq),
            in_specs=[
                pl.BlockSpec((None, tq, D), lambda b, qi: (b, qi, 0)),
                pl.BlockSpec((1, D), lambda b, qi: (0, 0)),
                pl.BlockSpec((D, 3 * D), lambda b, qi: (0, 0)),
            ],
            out_specs=[pl.BlockSpec((None, num_heads, tq, hd),
                                    lambda b, qi: (b, 0, qi, 0)) for _ in range(3)],
        ),
        compiler_params=cp(("parallel", "parallel")),
    )(x, ln1w, wqkv)

    # ---- Kernel B: flash attention over lower-triangular tile pairs ----
    qi_list, ki_list = [], []
    for q_idx in range(nq):
        for k_idx in range(q_idx + 1):
            qi_list.append(q_idx)
            ki_list.append(k_idx)
    qi_tab = jnp.asarray(qi_list, jnp.int32)
    ki_tab = jnp.asarray(ki_list, jnp.int32)
    n_pairs = len(qi_list)

    x1 = pl.pallas_call(
        functools.partial(_attn_kernel, num_heads=num_heads, head_dim=hd, tq=tq, tk=tk),
        out_shape=jax.ShapeDtypeStruct((B, S, D), jnp.float32),
        grid_spec=pltpu.PrefetchScalarGridSpec(
            num_scalar_prefetch=2,
            grid=(B, n_pairs),
            in_specs=[
                pl.BlockSpec((None, num_heads, tq, hd),
                             lambda b, p, qt, kt: (b, 0, qt[p], 0)),      # Q
                pl.BlockSpec((None, num_heads, tk, hd),
                             lambda b, p, qt, kt: (b, 0, kt[p], 0)),      # K
                pl.BlockSpec((None, num_heads, tk, hd),
                             lambda b, p, qt, kt: (b, 0, kt[p], 0)),      # V
                pl.BlockSpec((None, tq, D),
                             lambda b, p, qt, kt: (b, qt[p], 0)),         # x (residual)
                pl.BlockSpec((num_heads, hd, D),
                             lambda b, p, qt, kt: (0, 0, 0)),             # Wproj (per head)
                pl.BlockSpec((1, D), lambda b, p, qt, kt: (0, 0)),        # proj bias
            ],
            out_specs=pl.BlockSpec((None, tq, D),
                                   lambda b, p, qt, kt: (b, qt[p], 0)),
            scratch_shapes=[
                # TODO(synk): pack m/l into one buffer to halve lane-padding on v7x.
                pltpu.VMEM((num_heads, tq, 1), jnp.float32),   # m (online softmax)
                pltpu.VMEM((num_heads, tq, 1), jnp.float32),   # l
                pltpu.VMEM((num_heads, tq, hd), jnp.float32),  # acc
            ],
        ),
        compiler_params=cp(("parallel", "arbitrary")),
    )(qi_tab, ki_tab, q_hsd, k_hsd, v_hsd, x, wproj_h, bproj)

    # ---- Kernel C: LN2 -> MLP -> residual, dff tiled ----
    out = pl.pallas_call(
        _mlp_kernel,
        out_shape=jax.ShapeDtypeStruct((B, S, D), x.dtype),
        grid_spec=pltpu.PrefetchScalarGridSpec(
            num_scalar_prefetch=0,
            grid=(B, nq, ndff),
            in_specs=[
                pl.BlockSpec((None, tq, D), lambda b, qi, di: (b, qi, 0)),
                pl.BlockSpec((1, D), lambda b, qi, di: (0, 0)),
                pl.BlockSpec((D, tdff), lambda b, qi, di: (0, di)),
                pl.BlockSpec((tdff, D), lambda b, qi, di: (di, 0)),
            ],
            out_specs=pl.BlockSpec((None, tq, D), lambda b, qi, di: (b, qi, 0)),
            scratch_shapes=[
                pltpu.VMEM((tq, D), bf16),          # cached LN2(x1)
                pltpu.VMEM((tq, D), jnp.float32),   # MLP accumulator
            ],
        ),
        compiler_params=cp(("parallel", "parallel", "arbitrary")),
    )(x1, ln2w, w1, w2)

    return out


def reference_block(x, params, *, num_heads: int):
    """Pure-JAX f32 reference mirroring the PyTorch forward (use_cache=False)."""
    B, S, D = x.shape
    hd = D // num_heads

    h1 = _layernorm(x, params["ln1_w"])
    qkv = h1 @ params["wqkv"]                                    # (B, S, 3D)
    qkv = qkv.reshape(B, S, 3, num_heads, hd).transpose(2, 0, 3, 1, 4)
    q, k, v = qkv[0], qkv[1], qkv[2]                             # (B, H, S, hd)
    s = jnp.einsum("bhqd,bhkd->bhqk", q, k) / math.sqrt(hd)
    mask = jnp.tril(jnp.ones((S, S), bool))
    s = jnp.where(mask, s, -1e30)
    p = jax.nn.softmax(s, axis=-1)
    o = jnp.einsum("bhqk,bhkd->bhqd", p, v)                      # (B, H, S, hd)
    o = o.transpose(0, 2, 1, 3).reshape(B, S, D)
    attn = o @ params["wproj"] + params["bproj"]
    x = x + attn

    h2 = _layernorm(x, params["ln2_w"])
    ff = jax.nn.gelu(h2 @ params["w1"], approximate=False) @ params["w2"]
    return x + ff


if __name__ == "__main__":
    # Small shapes that still exercise: multiple q/kv tiles (nq=4 -> 10 triangular
    # pairs), the diagonal-only mask path, multi-head batched einsums, and the
    # dff-tiled MLP reduction (ndff=2).
    B, S, D, H, DFF = 2, 64, 64, 4, 256

    key = jax.random.PRNGKey(0)
    kx, k1, k2, k3, k4, k5, k6, k7 = jax.random.split(key, 8)

    x = jax.random.normal(kx, (B, S, D), dtype=jnp.float32)

    params = {
        "ln1_w": 1.0 + 0.1 * jax.random.normal(k6, (1, D), jnp.float32),
        "wqkv":  jax.random.normal(k1, (D, 3 * D), jnp.float32) * 0.05,  # (d_in, 3*d_out)
        "wproj": jax.random.normal(k2, (D, D), jnp.float32) * 0.05,
        "bproj": jax.random.normal(k3, (1, D), jnp.float32) * 0.05,
        "ln2_w": 1.0 + 0.1 * jax.random.normal(k7, (1, D), jnp.float32),
        "w1":    jax.random.normal(k4, (D, DFF), jnp.float32) * 0.05,
        "w2":    jax.random.normal(k5, (DFF, D), jnp.float32) * 0.05,
    }

    out = optimized_transformer_block(x, params, num_heads=H, tile_q=16, tile_dff=128)
    out = jax.block_until_ready(out)

    ref = reference_block(x, params, num_heads=H)
    assert out.shape == (B, S, D)
    # bf16 MXU operands (f32 accumulation) + approx reciprocal => small drift vs f32 ref
    assert jnp.allclose(out, ref, atol=2e-2, rtol=2e-2), "mismatch vs JAX reference"

    print("KERNEL_OK")
</pallas_src>

<mosaic_0001>
module attributes {stable_mosaic.version = 11 : i64} {
  func.func @_qkv_kernel(%arg0: i32, %arg1: i32, %arg2: memref<1x16x64xf32, #tpu.memory_space<vmem>>, %arg3: memref<1x64xf32, #tpu.memory_space<vmem>>, %arg4: memref<64x192xbf16, #tpu.memory_space<vmem>>, %arg5: memref<1x4x16x16xbf16, #tpu.memory_space<vmem>>, %arg6: memref<1x4x16x16xbf16, #tpu.memory_space<vmem>>, %arg7: memref<1x4x16x16xbf16, #tpu.memory_space<vmem>>) attributes {dimension_semantics = [#tpu.dimension_semantics<parallel>, #tpu.dimension_semantics<parallel>], iteration_bounds = array<i64: 2, 4>, scalar_prefetch = 0 : i64, scratch_operands = 0 : i64, tpu.core_type = #tpu.core_type<tc>, window_params = [{transform_indices = @transform_0, window_bounds = array<i64: 1, 16, 64>}, {pipeline_mode = #tpu.pipeline_mode<synchronous>, transform_indices = @transform_1, window_bounds = array<i64: 1, 64>}, {pipeline_mode = #tpu.pipeline_mode<synchronous>, transform_indices = @transform_2, window_bounds = array<i64: 64, 192>}, {transform_indices = @transform_3, window_bounds = array<i64: 1, 4, 16, 16>}, {transform_indices = @transform_4, window_bounds = array<i64: 1, 4, 16, 16>}, {transform_indices = @transform_5, window_bounds = array<i64: 1, 4, 16, 16>}]} {
    %c0 = arith.constant 0 : index
    %c0_0 = arith.constant 0 : index
    %c0_1 = arith.constant 0 : index
    %0 = vector.load %arg2[%c0, %c0_0, %c0_1] : memref<1x16x64xf32, #tpu.memory_space<vmem>>, vector<1x16x64xf32>
    %1 = vector.shape_cast %0 : vector<1x16x64xf32> to vector<16x64xf32>
    %c0_2 = arith.constant 0 : index
    %c0_3 = arith.constant 0 : index
    %2 = vector.load %arg3[%c0_2, %c0_3] : memref<1x64xf32, #tpu.memory_space<vmem>>, vector<1x64xf32>
    %cst = arith.constant dense<0.000000e+00> : vector<16xf32>
    %3 = vector.multi_reduction <add>, %1, %cst [1] : vector<16x64xf32> to vector<16xf32>
    %4 = vector.shape_cast %3 : vector<16xf32> to vector<16x1xf32>
    %cst_4 = arith.constant 6.400000e+01 : f32
    %5 = vector.broadcast %cst_4 : f32 to vector<16x1xf32>
    %6 = arith.divf %4, %5 : vector<16x1xf32>
    %7 = vector.broadcast %6 : vector<16x1xf32> to vector<16x64xf32>
    %8 = arith.subf %1, %7 : vector<16x64xf32>
    %9 = arith.mulf %8, %8 : vector<16x64xf32>
    %cst_5 = arith.constant dense<0.000000e+00> : vector<16xf32>
    %10 = vector.multi_reduction <add>, %9, %cst_5 [1] : vector<16x64xf32> to vector<16xf32>
    %11 = vector.shape_cast %10 : vector<16xf32> to vector<16x1xf32>
    %cst_6 = arith.constant 6.400000e+01 : f32
    %12 = vector.broadcast %cst_6 : f32 to vector<16x1xf32>
    %13 = arith.divf %11, %12 : vector<16x1xf32>
    %14 = vector.broadcast %6 : vector<16x1xf32> to vector<16x64xf32>
    %15 = arith.subf %1, %14 : vector<16x64xf32>
    %cst_7 = arith.constant 9.99999974E-6 : f32
    %16 = vector.broadcast %cst_7 : f32 to vector<16x1xf32>
    %17 = arith.addf %13, %16 : vector<16x1xf32>
    %18 = math.rsqrt %17 : vector<16x1xf32>
    %19 = vector.broadcast %18 : vector<16x1xf32> to vector<16x64xf32>
    %20 = arith.mulf %15, %19 : vector<16x64xf32>
    %21 = vector.broadcast %2 : vector<1x64xf32> to vector<16x64xf32>
    %22 = arith.mulf %20, %21 : vector<16x64xf32>
    %23 = arith.truncf %22 : vector<16x64xf32> to vector<16x64xbf16>
    %c0_8 = arith.constant 0 : index
    %c0_9 = arith.constant 0 : index
    %24 = vector.load %arg4[%c0_8, %c0_9] : memref<64x192xbf16, #tpu.memory_space<vmem>>, vector<64x192xbf16>
    %cst_10 = arith.constant dense<0.000000e+00> : vector<16x192xf32>
    %25 = tpu.matmul %23, %24, %cst_10 {dimension_numbers = #tpu.dot_dimension_numbers<[1], [0], [0], [1], [0, 0, 1, 1], [], []>} : vector<16x64xbf16>, vector<64x192xbf16>, vector<16x192xf32> -> vector<16x192xf32>
    %26 = vector.extract_strided_slice %25 {offsets = [0, 0], sizes = [16, 16], strides = [1, 1]} : vector<16x192xf32> to vector<16x16xf32>
    %27 = arith.truncf %26 : vector<16x16xf32> to vector<16x16xbf16>
    %c0_11 = arith.constant 0 : index
    %c0_12 = arith.constant 0 : index
    %c0_13 = arith.constant 0 : index
    %c0_14 = arith.constant 0 : index
    %28 = vector.load %arg5[%c0_11, %c0_12, %c0_13, %c0_14] : memref<1x4x16x16xbf16, #tpu.memory_space<vmem>>, vector<1x1x16x16xbf16>
    %29 = vector.shape_cast %28 : vector<1x1x16x16xbf16> to vector<16x16xbf16>
    %30 = vector.shape_cast %27 : vector<16x16xbf16> to vector<1x1x16x16xbf16>
    tpu.vector_store %arg5[%c0_11, %c0_12, %c0_13, %c0_14], %30 {strides = array<i32>} : memref<1x4x16x16xbf16, #tpu.memory_space<vmem>>, vector<1x1x16x16xbf16>,
    %31 = vector.extract_strided_slice %25 {offsets = [0, 64], sizes = [16, 16], strides = [1, 1]} : vector<16x192xf32> to vector<16x16xf32>
    %32 = arith.truncf %31 : vector<16x16xf32> to vector<16x16xbf16>
    %c0_15 = arith.constant 0 : index
    %c0_16 = arith.constant 0 : index
    %c0_17 = arith.constant 0 : index
    %c0_18 = arith.constant 0 : index
    %33 = vector.load %arg6[%c0_15, %c0_16, %c0_17, %c0_18] : memref<1x4x16x16xbf16, #tpu.memory_space<vmem>>, vector<1x1x16x16xbf16>
    %34 = vector.shape_cast %33 : vector<1x1x16x16xbf16> to vector<16x16xbf16>
    %35 = vector.shape_cast %32 : vector<16x16xbf16> to vector<1x1x16x16xbf16>
    tpu.vector_store %arg6[%c0_15, %c0_16, %c0_17, %c0_18], %35 {strides = array<i32>} : memref<1x4x16x16xbf16, #tpu.memory_space<vmem>>, vector<1x1x16x16xbf16>,
    %36 = vector.extract_strided_slice %25 {offsets = [0, 128], sizes = [16, 16], strides = [1, 1]} : vector<16x192xf32> to vector<16x16xf32>
    %37 = arith.truncf %36 : vector<16x16xf32> to vector<16x16xbf16>
    %c0_19 = arith.constant 0 : index
    %c0_20 = arith.constant 0 : index
    %c0_21 = arith.constant 0 : index
    %c0_22 = arith.constant 0 : index
    %38 = vector.load %arg7[%c0_19, %c0_20, %c0_21, %c0_22] : memref<1x4x16x16xbf16, #tpu.memory_space<vmem>>, vector<1x1x16x16xbf16>
    %39 = vector.shape_cast %38 : vector<1x1x16x16xbf16> to vector<16x16xbf16>
    %40 = vector.shape_cast %37 : vector<16x16xbf16> to vector<1x1x16x16xbf16>
    tpu.vector_store %arg7[%c0_19, %c0_20, %c0_21, %c0_22], %40 {strides = array<i32>} : memref<1x4x16x16xbf16, #tpu.memory_space<vmem>>, vector<1x1x16x16xbf16>,
    %41 = vector.extract_strided_slice %25 {offsets = [0, 16], sizes = [16, 16], strides = [1, 1]} : vector<16x192xf32> to vector<16x16xf32>
    %42 = arith.truncf %41 : vector<16x16xf32> to vector<16x16xbf16>
    %c0_23 = arith.constant 0 : index
    %c1 = arith.constant 1 : index
    %c0_24 = arith.constant 0 : index
    %c0_25 = arith.constant 0 : index
    %43 = vector.load %arg5[%c0_23, %c1, %c0_24, %c0_25] : memref<1x4x16x16xbf16, #tpu.memory_space<vmem>>, vector<1x1x16x16xbf16>
    %44 = vector.shape_cast %43 : vector<1x1x16x16xbf16> to vector<16x16xbf16>
    %45 = vector.shape_cast %42 : vector<16x16xbf16> to vector<1x1x16x16xbf16>
    tpu.vector_store %arg5[%c0_23, %c1, %c0_24, %c0_25], %45 {strides = array<i32>} : memref<1x4x16x16xbf16, #tpu.memory_space<vmem>>, vector<1x1x16x16xbf16>,
    %46 = vector.extract_strided_slice %25 {offsets = [0, 80], sizes = [16, 16], strides = [1, 1]} : vector<16x192xf32> to vector<16x16xf32>
    %47 = arith.truncf %46 : vector<16x16xf32> to vector<16x16xbf16>
    %c0_26 = arith.constant 0 : index
    %c1_27 = arith.constant 1 : index
    %c0_28 = arith.constant 0 : index
    %c0_29 = arith.constant 0 : index
    %48 = vector.load %arg6[%c0_26, %c1_27, %c0_28, %c0_29] : memref<1x4x16x16xbf16, #tpu.memory_space<vmem>>, vector<1x1x16x16xbf16>
    %49 = vector.shape_cast %48 : vector<1x1x16x16xbf16> to vector<16x16xbf16>
    %50 = vector.shape_cast %47 : vector<16x16xbf16> to vector<1x1x16x16xbf16>
    tpu.vector_store %arg6[%c0_26, %c1_27, %c0_28, %c0_29], %50 {strides = array<i32>} : memref<1x4x16x16xbf16, #tpu.memory_space<vmem>>, vector<1x1x16x16xbf16>,
    %51 = vector.extract_strided_slice %25 {offsets = [0, 144], sizes = [16, 16], strides = [1, 1]} : vector<16x192xf32> to vector<16x16xf32>
    %52 = arith.truncf %51 : vector<16x16xf32> to vector<16x16xbf16>
    %c0_30 = arith.constant 0 : index
    %c1_31 = arith.constant 1 : index
    %c0_32 = arith.constant 0 : index
    %c0_33 = arith.constant 0 : index
    %53 = vector.load %arg7[%c0_30, %c1_31, %c0_32, %c0_33] : memref<1x4x16x16xbf16, #tpu.memory_space<vmem>>, vector<1x1x16x16xbf16>
    %54 = vector.shape_cast %53 : vector<1x1x16x16xbf16> to vector<16x16xbf16>
    %55 = vector.shape_cast %52 : vector<16x16xbf16> to vector<1x1x16x16xbf16>
    tpu.vector_store %arg7[%c0_30, %c1_31, %c0_32, %c0_33], %55 {strides = array<i32>} : memref<1x4x16x16xbf16, #tpu.memory_space<vmem>>, vector<1x1x16x16xbf16>,
    %56 = vector.extract_strided_slice %25 {offsets = [0, 32], sizes = [16, 16], strides = [1, 1]} : vector<16x192xf32> to vector<16x16xf32>
    %57 = arith.truncf %56 : vector<16x16xf32> to vector<16x16xbf16>
    %c0_34 = arith.constant 0 : index
    %c2 = arith.constant 2 : index
    %c0_35 = arith.constant 0 : index
    %c0_36 = arith.constant 0 : index
    %58 = vector.load %arg5[%c0_34, %c2, %c0_35, %c0_36] : memref<1x4x16x16xbf16, #tpu.memory_space<vmem>>, vector<1x1x16x16xbf16>
    %59 = vector.shape_cast %58 : vector<1x1x16x16xbf16> to vector<16x16xbf16>
    %60 = vector.shape_cast %57 : vector<16x16xbf16> to vector<1x1x16x16xbf16>
    tpu.vector_store %arg5[%c0_34, %c2, %c0_35, %c0_36], %60 {strides = array<i32>} : memref<1x4x16x16xbf16, #tpu.memory_space<vmem>>, vector<1x1x16x16xbf16>,
    %61 = vector.extract_strided_slice %25 {offsets = [0, 96], sizes = [16, 16], strides = [1, 1]} : vector<16x192xf32> to vector<16x16xf32>
    %62 = arith.truncf %61 : vector<16x16xf32> to vector<16x16xbf16>
    %c0_37 = arith.constant 0 : index
    %c2_38 = arith.constant 2 : index
    %c0_39 = arith.constant 0 : index
    %c0_40 = arith.constant 0 : index
    %63 = vector.load %arg6[%c0_37, %c2_38, %c0_39, %c0_40] : memref<1x4x16x16xbf16, #tpu.memory_space<vmem>>, vector<1x1x16x16xbf16>
    %64 = vector.shape_cast %63 : vector<1x1x16x16xbf16> to vector<16x16xbf16>
    %65 = vector.shape_cast %62 : vector<16x16xbf16> to vector<1x1x16x16xbf16>
    tpu.vector_store %arg6[%c0_37, %c2_38, %c0_39, %c0_40], %65 {strides = array<i32>} : memref<1x4x16x16xbf16, #tpu.memory_space<vmem>>, vector<1x1x16x16xbf16>,
    %66 = vector.extract_strided_slice %25 {offsets = [0, 160], sizes = [16, 16], strides = [1, 1]} : vector<16x192xf32> to vector<16x16xf32>
    %67 = arith.truncf %66 : vector<16x16xf32> to vector<16x16xbf16>
    %c0_41 = arith.constant 0 : index
    %c2_42 = arith.constant 2 : index
    %c0_43 = arith.constant 0 : index
    %c0_44 = arith.constant 0 : index
    %68 = vector.load %arg7[%c0_41, %c2_42, %c0_43, %c0_44] : memref<1x4x16x16xbf16, #tpu.memory_space<vmem>>, vector<1x1x16x16xbf16>
    %69 = vector.shape_cast %68 : vector<1x1x16x16xbf16> to vector<16x16xbf16>
    %70 = vector.shape_cast %67 : vector<16x16xbf16> to vector<1x1x16x16xbf16>
    tpu.vector_store %arg7[%c0_41, %c2_42, %c0_43, %c0_44], %70 {strides = array<i32>} : memref<1x4x16x16xbf16, #tpu.memory_space<vmem>>, vector<1x1x16x16xbf16>,
    %71 = vector.extract_strided_slice %25 {offsets = [0, 48], sizes = [16, 16], strides = [1, 1]} : vector<16x192xf32> to vector<16x16xf32>
    %72 = arith.truncf %71 : vector<16x16xf32> to vector<16x16xbf16>
    %c0_45 = arith.constant 0 : index
    %c3 = arith.constant 3 : index
    %c0_46 = arith.constant 0 : index
    %c0_47 = arith.constant 0 : index
    %73 = vector.load %arg5[%c0_45, %c3, %c0_46, %c0_47] : memref<1x4x16x16xbf16, #tpu.memory_space<vmem>>, vector<1x1x16x16xbf16>
    %74 = vector.shape_cast %73 : vector<1x1x16x16xbf16> to vector<16x16xbf16>
    %75 = vector.shape_cast %72 : vector<16x16xbf16> to vector<1x1x16x16xbf16>
    tpu.vector_store %arg5[%c0_45, %c3, %c0_46, %c0_47], %75 {strides = array<i32>} : memref<1x4x16x16xbf16, #tpu.memory_space<vmem>>, vector<1x1x16x16xbf16>,
    %76 = vector.extract_strided_slice %25 {offsets = [0, 112], sizes = [16, 16], strides = [1, 1]} : vector<16x192xf32> to vector<16x16xf32>
    %77 = arith.truncf %76 : vector<16x16xf32> to vector<16x16xbf16>
    %c0_48 = arith.constant 0 : index
    %c3_49 = arith.constant 3 : index
    %c0_50 = arith.constant 0 : index
    %c0_51 = arith.constant 0 : index
    %78 = vector.load %arg6[%c0_48, %c3_49, %c0_50, %c0_51] : memref<1x4x16x16xbf16, #tpu.memory_space<vmem>>, vector<1x1x16x16xbf16>
    %79 = vector.shape_cast %78 : vector<1x1x16x16xbf16> to vector<16x16xbf16>
    %80 = vector.shape_cast %77 : vector<16x16xbf16> to vector<1x1x16x16xbf16>
    tpu.vector_store %arg6[%c0_48, %c3_49, %c0_50, %c0_51], %80 {strides = array<i32>} : memref<1x4x16x16xbf16, #tpu.memory_space<vmem>>, vector<1x1x16x16xbf16>,
    %81 = vector.extract_strided_slice %25 {offsets = [0, 176], sizes = [16, 16], strides = [1, 1]} : vector<16x192xf32> to vector<16x16xf32>
    %82 = arith.truncf %81 : vector<16x16xf32> to vector<16x16xbf16>
    %c0_52 = arith.constant 0 : index
    %c3_53 = arith.constant 3 : index
    %c0_54 = arith.constant 0 : index
    %c0_55 = arith.constant 0 : index
    %83 = vector.load %arg7[%c0_52, %c3_53, %c0_54, %c0_55] : memref<1x4x16x16xbf16, #tpu.memory_space<vmem>>, vector<1x1x16x16xbf16>
    %84 = vector.shape_cast %83 : vector<1x1x16x16xbf16> to vector<16x16xbf16>
    %85 = vector.shape_cast %82 : vector<16x16xbf16> to vector<1x1x16x16xbf16>
    tpu.vector_store %arg7[%c0_52, %c3_53, %c0_54, %c0_55], %85 {strides = array<i32>} : memref<1x4x16x16xbf16, #tpu.memory_space<vmem>>, vector<1x1x16x16xbf16>,
    return
  }
  func.func @transform_0(%arg0: i32, %arg1: i32) -> (i32, i32, i32) {
    %c0_i32 = arith.constant 0 : i32
    %c0_i32_0 = arith.constant 0 : i32
    return %arg0, %arg1, %c0_i32 : i32, i32, i32
  }
  func.func @transform_1(%arg0: i32, %arg1: i32) -> (i32, i32) {
    %c0_i32 = arith.constant 0 : i32
    %c0_i32_0 = arith.constant 0 : i32
    %c0_i32_1 = arith.constant 0 : i32
    return %c0_i32, %c0_i32_0 : i32, i32
  }
  func.func @transform_2(%arg0: i32, %arg1: i32) -> (i32, i32) {
    %c0_i32 = arith.constant 0 : i32
    %c0_i32_0 = arith.constant 0 : i32
    %c0_i32_1 = arith.constant 0 : i32
    return %c0_i32, %c0_i32_0 : i32, i32
  }
  func.func @transform_3(%arg0: i32, %arg1: i32) -> (i32, i32, i32, i32) {
    %c0_i32 = arith.constant 0 : i32
    %c0_i32_0 = arith.constant 0 : i32
    %c0_i32_1 = arith.constant 0 : i32
    return %arg0, %c0_i32, %arg1, %c0_i32_0 : i32, i32, i32, i32
  }
  func.func @transform_4(%arg0: i32, %arg1: i32) -> (i32, i32, i32, i32) {
    %c0_i32 = arith.constant 0 : i32
    %c0_i32_0 = arith.constant 0 : i32
    %c0_i32_1 = arith.constant 0 : i32
    return %arg0, %c0_i32, %arg1, %c0_i32_0 : i32, i32, i32, i32
  }
  func.func @transform_5(%arg0: i32, %arg1: i32) -> (i32, i32, i32, i32) {
    %c0_i32 = arith.constant 0 : i32
    %c0_i32_0 = arith.constant 0 : i32
    %c0_i32_1 = arith.constant 0 : i32
    return %arg0, %c0_i32, %arg1, %c0_i32_0 : i32, i32, i32, i32
  }
}

</mosaic_0001>

<llo_original>
// kernel: tpu_custom_call.1
$region0: #{tpu_custom_call.1}
  #allocation0 [shape = 'u32[]', space=smem, size = 0x4, offset = 0x4, fixed_abs, tag = 'smem constant byte address 0x4 - core index']
  #allocation1 [shape = 'u32[144,128]{1,0:T(1,128)}', space=vmem, size = 0x12000, scoped, tag = 'internal scratch']
  %s0 = inlined_call_operand.hbm [shape: f32[2,64,64], index: 0, kind: input, shape index: {}]
  %s1 = inlined_call_operand.vmem [shape: f32[1,64], index: 1, kind: input, shape index: {}]
  %s2 = inlined_call_operand.hbm [shape: bf16[64,192], index: 2, kind: input, shape index: {}]
  %s3 = inlined_call_operand.vmem [shape: bf16[2,4,64,16], index: 3, kind: output, shape index: {0}]
  %s4 = inlined_call_operand.vmem [shape: bf16[2,4,64,16], index: 4, kind: output, shape index: {1}]
  %s5 = inlined_call_operand.vmem [shape: bf16[2,4,64,16], index: 5, kind: output, shape index: {2}]
  %6 = xla_tuple %s3, %s4, %s5
  %s7 = sld [smem:[#allocation0]]
  $region180: #{tpu_custom_call.1} parent=0
    _
  %s9 = ssub.s32 1, %s7
  %s10 = scalar_select 0, %s9, %s7
  $region1: #{tpu_custom_call.1} parent=0
    #allocation2 [shape = 'u8[16384]{0}', space=vmem, size = 0x4000, scoped, tag = 'input window, operand 0']
    #allocation3 [shape = 's32[2]{0}', space=sflag, size = 0x8, scoped, tag = 'scoped memory for tpu_custom_call.1']
    #allocation4 [shape = 'u8[32768]{0}', space=vmem, size = 0x8000, scoped, tag = 'input window, operand 2, single buffered']
    #allocation5 [shape = 's32[1]{0}', space=sflag, size = 0x4, scoped, tag = 'scoped memory for tpu_custom_call.1']
    #allocation6 [shape = 'u8[32768]{0}', space=vmem, size = 0x8000, scoped, tag = 'output window, operand 0']
    #allocation7 [shape = 'u8[32768]{0}', space=vmem, size = 0x8000, scoped, tag = 'output window, operand 1']
    #allocation8 [shape = 'u8[32768]{0}', space=vmem, size = 0x8000, scoped, tag = 'output window, operand 2']
    %11 = vsyncpa [#allocation3], 0
    %s12 = scalar_lea.sflag [#allocation3], 1
    %13 = vsyncpa %s12, 0
    %14 = vsyncpa [#allocation5], 0
    loop: start=0, step=1, limit=10
    $region2: #{tpu_custom_call.1} parent=1 // loop_pre_header
      _
    $region3: #{tpu_custom_call.1} parent=1 // loop_header
      %s16 = sphi 0, %s20
      %p17 = scmp.ge.s32.totalorder %s16, 10
      %s23 = sphi 0, %s35
      %s24 = sphi 0, %s31
      %s25 = sphi 0, %s23
      %s26 = sphi 0, %s24
      %s27 = sphi 0, %s25
      %s28 = sphi 0, %s26
      %s40 = sphi 0, %s42
      %s43 = sphi 0, %s40
      %s44 = sphi 0, %s43
      %s60 = sphi 0, %s44
      %s64 = sphi 0, %s64
      %s66 = sphi 0, %s64
      %s67 = sphi 0, %s66
      %s81 = sphi 0, %s67
      %s85 = sphi 0, %s85
      %s87 = sphi 0, %s85
      %s88 = sphi 0, %s87
      %s102 = sphi 0, %s88
      %s110 = sphi 0, %s112
      %s113 = sphi 0, %s110
      %s114 = sphi 0, %s113
      %s130 = sphi 0, %s114
      %s138 = sphi 0, %s140
      %s141 = sphi 0, %s138
      %s142 = sphi 0, %s141
      %s158 = sphi 0, %s142
      %s166 = sphi 0, %s168
      %s169 = sphi 0, %s166
      %s170 = sphi 0, %s169
      %s186 = sphi 0, %s170
    $region4: #{tpu_custom_call.1} parent=1 // loop_header_branch
      %19 = sbr.rel (%p17) target = $region8
    $region5: #{tpu_custom_call.1} parent=1 // loop_body
      %s21 = ssub.s32 %s16, 1
      %s22 = ssub.s32 %s16, 2
      %s29 = sadd.s32 1, %s24
      %p30 = scmp.ge.s32.totalorder %s29, 4
      %s31 = scalar_select %p30, 0, %s29
      %s32 = sadd.s32 1, %s23
      %s33 = scalar_select %p30, %s32, %s23
      %p34 = scmp.ge.s32.totalorder %s33, 2
      %s35 = scalar_select %p34, 0, %s33
      %s36 = ssub.s32 %s23, %s35
      %s37 = ssub.s32 %s24, %s31
      %s38 = sor.u32 %s36, %s37
      %p39 = scmp.eq.s32.totalorder %s38, 0
      %s41 = sadd.s32 %s40, 1
      %s42 = scalar_select %p39, %s40, %s41
      %p45 = pneg %p39
      %p46 = scmp.eq.s32.totalorder %s16, 7
      %p47 = por %p45, %p46
      %p48 = scmp.ne.s32.totalorder %s40, %s43
      %p49 = scmp.eq.s32.totalorder %s16, 0
      %p50 = por %p48, %p49
      %p51 = scmp.ne.s32.totalorder %s40, %s43
      %p52 = scmp.eq.s32.totalorder %s21, 7
      %p53 = por %p51, %p52
      %p54 = scmp.ne.s32.totalorder %s43, %s44
      %p55 = scmp.eq.s32.totalorder %s21, 0
      %p56 = por %p54, %p55
      %p57 = scmp.ne.s32.totalorder %s43, %s44
      %p58 = scmp.eq.s32.totalorder %s22, 7
      %p59 = por %p57, %p58
      %p61 = scmp.ne.s32.totalorder %s44, %s60
      %p62 = scmp.eq.s32.totalorder %s22, 0
      %p63 = por %p61, %p62
      %s65 = sadd.s32 %s64, 1
      %p68 = scmp.eq.s32.totalorder %s16, 7
      %p69 = scmp.ne.s32.totalorder %s64, %s66
      %p70 = scmp.eq.s32.totalorder %s16, 0
      %p71 = por %p69, %p70
      %p72 = scmp.ne.s32.totalorder %s64, %s66
      %p73 = scmp.eq.s32.totalorder %s21, 7
      %p74 = por %p72, %p73
      %p75 = scmp.ne.s32.totalorder %s66, %s67
      %p76 = scmp.eq.s32.totalorder %s21, 0
      %p77 = por %p75, %p76
      %p78 = scmp.ne.s32.totalorder %s66, %s67
      %p79 = scmp.eq.s32.totalorder %s22, 7
      %p80 = por %p78, %p79
      %p82 = scmp.ne.s32.totalorder %s67, %s81
      %p83 = scmp.eq.s32.totalorder %s22, 0
      %p84 = por %p82, %p83
      %s86 = sadd.s32 %s85, 1
      %p89 = scmp.eq.s32.totalorder %s16, 7
      %p90 = scmp.ne.s32.totalorder %s85, %s87
      %p91 = scmp.eq.s32.totalorder %s16, 0
      %p92 = por %p90, %p91
      %p93 = scmp.ne.s32.totalorder %s85, %s87
      %p94 = scmp.eq.s32.totalorder %s21, 7
      %p95 = por %p93, %p94
      %p96 = scmp.ne.s32.totalorder %s87, %s88
      %p97 = scmp.eq.s32.totalorder %s21, 0
      %p98 = por %p96, %p97
      %p99 = scmp.ne.s32.totalorder %s87, %s88
      %p100 = scmp.eq.s32.totalorder %s22, 7
      %p101 = por %p99, %p100
      %p103 = scmp.ne.s32.totalorder %s88, %s102
      %p104 = scmp.eq.s32.totalorder %s22, 0
      %p105 = por %p103, %p104
      %s106 = ssub.s32 %s23, %s35
      %s107 = ssub.s32 %s24, %s31
      %s108 = sor.u32 %s106, %s107
      %p109 = scmp.eq.s32.totalorder %s108, 0
      %s111 = sadd.s32 %s110, 1
      %s112 = scalar_select %p109, %s110, %s111
      %p115 = pneg %p109
      %p116 = scmp.eq.s32.totalorder %s16, 7
      %p117 = por %p115, %p116
      %p118 = scmp.ne.s32.totalorder %s110, %s113
      %p119 = scmp.eq.s32.totalorder %s16, 0
      %p120 = por %p118, %p119
      %p121 = scmp.ne.s32.totalorder %s110, %s113
      %p122 = scmp.eq.s32.totalorder %s21, 7
      %p123 = por %p121, %p122
      %p124 = scmp.ne.s32.totalorder %s113, %s114
      %p125 = scmp.eq.s32.totalorder %s21, 0
      %p126 = por %p124, %p125
      %p127 = scmp.ne.s32.totalorder %s113, %s114
      %p128 = scmp.eq.s32.totalorder %s22, 7
      %p129 = por %p127, %p128
      %p131 = scmp.ne.s32.totalorder %s114, %s130
      %p132 = scmp.eq.s32.totalorder %s22, 0
      %p133 = por %p131, %p132
      %s134 = ssub.s32 %s23, %s35
      %s135 = ssub.s32 %s24, %s31
      %s136 = sor.u32 %s134, %s135
      %p137 = scmp.eq.s32.totalorder %s136, 0
      %s139 = sadd.s32 %s138, 1
      %s140 = scalar_select %p137, %s138, %s139
      %p143 = pneg %p137
      %p144 = scmp.eq.s32.totalorder %s16, 7
      %p145 = por %p143, %p144
      %p146 = scmp.ne.s32.totalorder %s138, %s141
      %p147 = scmp.eq.s32.totalorder %s16, 0
      %p148 = por %p146, %p147
      %p149 = scmp.ne.s32.totalorder %s138, %s141
      %p150 = scmp.eq.s32.totalorder %s21, 7
      %p151 = por %p149, %p150
      %p152 = scmp.ne.s32.totalorder %s141, %s142
      %p153 = scmp.eq.s32.totalorder %s21, 0
      %p154 = por %p152, %p153
      %p155 = scmp.ne.s32.totalorder %s141, %s142
      %p156 = scmp.eq.s32.totalorder %s22, 7
      %p157 = por %p155, %p156
      %p159 = scmp.ne.s32.totalorder %s142, %s158
      %p160 = scmp.eq.s32.totalorder %s22, 0
      %p161 = por %p159, %p160
      %s162 = ssub.s32 %s23, %s35
      %s163 = ssub.s32 %s24, %s31
      %s164 = sor.u32 %s162, %s163
      %p165 = scmp.eq.s32.totalorder %s164, 0
      %s167 = sadd.s32 %s166, 1
      %s168 = scalar_select %p165, %s166, %s167
      %p171 = pneg %p165
      %p172 = scmp.eq.s32.totalorder %s16, 7
      %p173 = por %p171, %p172
      %p174 = scmp.ne.s32.totalorder %s166, %s169
      %p175 = scmp.eq.s32.totalorder %s16, 0
      %p176 = por %p174, %p175
      %p177 = scmp.ne.s32.totalorder %s166, %s169
      %p178 = scmp.eq.s32.totalorder %s21, 7
      %p179 = por %p177, %p178
      %p180 = scmp.ne.s32.totalorder %s169, %s170
      %p181 = scmp.eq.s32.totalorder %s21, 0
      %p182 = por %p180, %p181
      %p183 = scmp.ne.s32.totalorder %s169, %s170
      %p184 = scmp.eq.s32.totalorder %s22, 7
      %p185 = por %p183, %p184
      %p187 = scmp.ne.s32.totalorder %s170, %s186
      %p188 = scmp.eq.s32.totalorder %s22, 0
      %p189 = por %p187, %p188
      %p190 = scmp.le.s32.totalorder 1, %s16
      %p191 = scmp.lt.s32.totalorder %s16, 9
      %p192 = pnand %p190, %p191
      %p193 = pneg %p192
      // Predicated region
      $region9: #{tpu_custom_call.1} parent=5 // pred_check
        _
      $region10: #{tpu_custom_call.1} parent=5 // pred_check_branch
        %195 = sbr.rel (%p192) target = $region12
      $region11: #{tpu_custom_call.1} parent=5 // pred_region
        %s196 = ssub.s32 %s16, 1
        // Predicated region
        $region13: #{tpu_custom_call.1} parent=11 // pred_check
          %p197 = pneg %p77
        $region14: #{tpu_custom_call.1} parent=11 // pred_check_branch
          %199 = sbr.rel (%p197) target = $region16
        $region15: #{tpu_custom_call.1} parent=11 // pred_region
          _
        $region16: #{tpu_custom_call.1} parent=11 // pred_fallthru
          _
        // Predicated region
        $region17: #{tpu_custom_call.1} parent=11 // pred_check
          %p200 = pneg %p98
        $region18: #{tpu_custom_call.1} parent=11 // pred_check_branch
          %202 = sbr.rel (%p200) target = $region20
        $region19: #{tpu_custom_call.1} parent=11 // pred_region
          %s204 = ssub.s32 1024, 1024
          %205 = vsyncadd [#allocation5], %s204
          %s206 = sshll.u32 [#allocation4], 4
          %s207 = int_to_ptr.vmem [resolvable:$true] %s206
          %212 = dma.hbm_to_vmem [thread:$0]  %s2, 1024, %s207, [#allocation5], 128, 128, 8
        $region20: #{tpu_custom_call.1} parent=11 // pred_fallthru
          _
      $region12: #{tpu_custom_call.1} parent=5 // pred_fallthru
        _
      %p213 = scmp.lt.s32.totalorder %s16, 8
      // Predicated region
      $region21: #{tpu_custom_call.1} parent=5 // pred_check
        %p214 = pneg %p213
      $region22: #{tpu_custom_call.1} parent=5 // pred_check_branch
        %216 = sbr.rel (%p214) target = $region24
      $region23: #{tpu_custom_call.1} parent=5 // pred_region
        // Predicated region
        $region25: #{tpu_custom_call.1} parent=23 // pred_check
          %p217 = pneg %p50
        $region26: #{tpu_custom_call.1} parent=23 // pred_check_branch
          %219 = sbr.rel (%p217) target = $region28
        $region27: #{tpu_custom_call.1} parent=23 // pred_region
          %s220 = sand.u32 %s40, 1
          %s221 = scalar_lea.sflag [#allocation3], %s220
          %s222 = sand.u32 %s40, 1
          %s223 = smul.addr %s222, 16
          %s224 = scalar_lea.vmem [#allocation2], %s223
          %s225 = smul.u32 2, %s24
          %s227 = ssub.s32 256, 256
          %228 = vsyncadd %s221, %s227
          %s229 = smul.addr %s23, 8
          %s230 = sadd.s32 %s225, %s229
          %s231 = smul.addr %s230, 128
          %s232 = scalar_lea.hbm %s0, %s231
          %s233 = sshll.u32 %s224, 4
          %s234 = int_to_ptr.vmem [resolvable:$true] %s233
          %239 = dma.hbm_to_vmem [thread:$0]  %s232, 256, %s234, %s221, 128, 128, 8
        $region28: #{tpu_custom_call.1} parent=23 // pred_fallthru
          _
      $region24: #{tpu_custom_call.1} parent=5 // pred_fallthru
        _
      %p240 = scmp.le.s32.totalorder 1, %s16
      %p241 = scmp.lt.s32.totalorder %s16, 9
      %p242 = pnand %p240, %p241
      %p243 = pneg %p242
      // Predicated region
      $region29: #{tpu_custom_call.1} parent=5 // pred_check
        _
      $region30: #{tpu_custom_call.1} parent=5 // pred_check_branch
        %245 = sbr.rel (%p242) target = $region32
      $region31: #{tpu_custom_call.1} parent=5 // pred_region
        %s246 = ssub.s32 %s16, 1
        %s247 = sand.u32 %s43, 1
        %s248 = scalar_lea.sflag [#allocation3], %s247
        %s249 = sand.u32 %s43, 1
        %s250 = smul.addr %s249, 16
        %s251 = scalar_lea.vmem [#allocation2], %s250
        // Predicated region
        $region33: #{tpu_custom_call.1} parent=31 // pred_check
          %p252 = pneg %p56
        $region34: #{tpu_custom_call.1} parent=31 // pred_check_branch
          %254 = sbr.rel (%p252) target = $region36
        $region35: #{tpu_custom_call.1} parent=31 // pred_region
          %255 = dma.done %s248, 256
        $region36: #{tpu_custom_call.1} parent=31 // pred_fallthru
          _
        // Predicated region
        $region37: #{tpu_custom_call.1} parent=31 // pred_check
          %p256 = pneg %p98
        $region38: #{tpu_custom_call.1} parent=31 // pred_check_branch
          %258 = sbr.rel (%p256) target = $region40
        $region39: #{tpu_custom_call.1} parent=31 // pred_region
          %259 = dma.done [#allocation5], 1024
        $region40: #{tpu_custom_call.1} parent=31 // pred_fallthru
          _
        %s260 = sand.u32 %s43, 1
        %s261 = scalar_lea.sflag [#allocation3], %s260
        %s262 = sand.u32 %s43, 1
        %s263 = smul.addr %s262, 16
        %s264 = scalar_lea.vmem [#allocation2], %s263
        %p265 = pneg %p56
        %p266 = pneg %p53
        %p267 = pneg %p77
        %p268 = pneg %p74
        %p269 = pneg %p98
        %p270 = pneg %p95
        %p271 = pneg %p126
        %p272 = pneg %p123
        %s273 = sand.u32 %s113, 1
        %s274 = sand.u32 %s113, 1
        %s275 = smul.addr %s274, 32
        %s276 = scalar_lea.vmem [#allocation6], %s275
        %p277 = pneg %p154
        %p278 = pneg %p151
        %s279 = sand.u32 %s141, 1
        %s280 = sand.u32 %s141, 1
        %s281 = smul.addr %s280, 32
        %s282 = scalar_lea.vmem [#allocation7], %s281
        %p283 = pneg %p182
        %p284 = pneg %p179
        %s285 = sand.u32 %s169, 1
        %s286 = sand.u32 %s169, 1
        %s287 = smul.addr %s286, 32
        %s288 = scalar_lea.vmem [#allocation8], %s287
        %s289 = smul.u32 2, %s26
        %s290 = smul.u32 2, %s26
        %s291 = smul.u32 2, %s26
        %s292 = smul.u32 2, %s26
        %v294 = vld [vmem:[%s251] sm:$0xff]
        %v295 = vld [vmem:[%s251 + $0x8] sm:$0xff]
        %v296 = vld [vmem:[%s1] sm:$0x1]
        %vm297 = vcmask 523264
        %v298 = vsel %vm297, %v294, 0.0
        %299 = vadd.xlane.f32.xlu0 %v298
        %v300 = vpop.xlane.xlu0 %299
        %v301 = vsel %vm297, %v295, 0.0
        %302 = vadd.xlane.f32.xlu0 %v301
        %v303 = vpop.xlane.xlu0 %302
        %v304 = vrcp.pop 64.0
        %v305 = vmul.f32 %v300, %v304
        %v306 = vmul.f32 %v303, %v304
        %v307 = vsub.f32 %v294, %v305
        %v308 = vsub.f32 %v295, %v306
        %v309 = vmul.f32 %v307, %v307
        %v310 = vmul.f32 %v308, %v308
        %v311 = vsel %vm297, %v309, 0.0
        %312 = vadd.xlane.f32.xlu0 %v311
        %v313 = vpop.xlane.xlu0 %312
        %v314 = vsel %vm297, %v310, 0.0
        %315 = vadd.xlane.f32.xlu0 %v314
        %v316 = vpop.xlane.xlu0 %315
        %v317 = vmul.f32 %v313, %v304
        %v318 = vmul.f32 %v316, %v304
        %v319 = vadd.f32 %v317, 1e-05
        %v320 = vadd.f32 %v318, 1e-05
        %v321 = vrsqrt.pop %v319
        %v322 = vrsqrt.pop %v320
        %v323 = vmul.f32 %v307, %v321
        %v324 = vmul.f32 %v308, %v322
        %v326 = vlaneseq
        %v327 = vshrl.u32 %v326, 7
        %v328 = vsub.s32 0, %v327
        %v329 = vrot.slane %v296, %v328
        %v331 = vmul.f32 %v323, %v329
        %v332 = vmul.f32 %v324, %v329
        %v333 = vpack.c.bf16 %v332, %v331
        %v334 = vld [vmem:[#allocation4] sm:$0xff]
        %v335 = vld [vmem:[#allocation4 + $0x8] sm:$0xff]
        %v336 = vld [vmem:[#allocation4 + $0x10] sm:$0xff]
        %v337 = vld [vmem:[#allocation4 + $0x18] sm:$0xff]
        %v338 = vld [vmem:[#allocation4 + $0x20] sm:$0xff]
        %v339 = vld [vmem:[#allocation4 + $0x28] sm:$0xff]
        %v340 = vld [vmem:[#allocation4 + $0x30] sm:$0xff]
        %v341 = vld [vmem:[#allocation4 + $0x38] sm:$0xff]
        %v350 = vunpack.c.l.b16 %v334
        %v351 = vunpack.c.h.b16 %v334
        %v352 = vunpack.c.l.b16 %v335
        %v353 = vunpack.c.h.b16 %v335
        %v354 = vunpack.c.l.b16 %v336
        %v355 = vunpack.c.h.b16 %v336
        %v356 = vunpack.c.l.b16 %v337
        %v357 = vunpack.c.h.b16 %v337
        %v358 = vunpack.c.l.b16 %v338
        %v359 = vunpack.c.h.b16 %v338
        %v360 = vunpack.c.l.b16 %v339
        %v361 = vunpack.c.h.b16 %v339
        %v362 = vunpack.c.l.b16 %v340
        %v363 = vunpack.c.h.b16 %v340
        %v364 = vunpack.c.l.b16 %v341
        %v365 = vunpack.c.h.b16 %v341
        %v366 = vpack.c.b16 %v352, %v350
        %v367 = vpack.c.b16 %v353, %v351
        %v368 = vpack.c.b16 %v356, %v354
        %v369 = vpack.c.b16 %v357, %v355
        %v370 = vpack.c.b16 %v360, %v358
        %v371 = vpack.c.b16 %v361, %v359
        %v372 = vpack.c.b16 %v364, %v362
        %v373 = vpack.c.b16 %v365, %v363
        %v383 = vsel %vm297, %v333, 0
        %385 = vmatprep.subr.bf16.mxu0 %v367
        %386 = vmatpush1.bf16.msra.mxu0 %v366
        %387 = vmatprep.subr.bf16.mxu0 %v369
        %388 = vmatpush1.bf16.msra.mxu0 %v368
        %389 = vmatprep.subr.bf16.mxu0 %v371
        %390 = vmatpush1.bf16.msra.mxu0 %v370
        %391 = vmatprep.subr.bf16.mxu0 %v373
        %392 = vmatpush1.bf16.msra.mxu0 %v372
        %393 = vmatprep.subr.bf16.mxu0 0
        %394 = vmatpush1.bf16.msra.mxu0 0
        %395 = vmatprep.subr.bf16.mxu0 0
        %396 = vmatpush1.bf16.msra.mxu0 0
        %397 = vmatprep.subr.bf16.mxu0 0
        %398 = vmatpush1.bf16.msra.mxu0 0
        %399 = vmatprep.subr.bf16.mxu0 0
        %400 = vmatpush1.bf16.msra.mxu0 0
        %401 = vmatprep.subr.bf16.mxu0 0
        %402 = vmatpush1.bf16.msra.mxu0 0
        %403 = vmatprep.subr.bf16.mxu0 0
        %404 = vmatpush1.bf16.msra.mxu0 0
        %405 = vmatprep.subr.bf16.mxu0 0
        %406 = vmatpush1.bf16.msra.mxu0 0
        %407 = vmatprep.subr.bf16.mxu0 0
        %408 = vmatpush1.bf16.msra.mxu0 0
        %409 = vmatprep.subr.bf16.mxu0 0
        %410 = vmatpush1.bf16.msra.mxu0 0
        %411 = vmatprep.subr.bf16.mxu0 0
        %412 = vmatpush1.bf16.msra.mxu0 0
        %413 = vmatprep.subr.bf16.mxu0 0
        %414 = vmatpush1.bf16.msra.mxu0 0
        %415 = vmatprep.subr.bf16.mxu0 0
        %416 = vmatpush1.bf16.msra.mxu0 0
        %417 = vmatprep.mubr.bf16.mxu0 0
        %418 = vmatmul.mubr.bf16.gmra.mrb[0].mxu0 %v383
        %v419 = vpop.f32.mrb[0].mxu0
        %v420 = vadd.f32 0.0, %v419
        %v421 = vpop.f32.mrb[0].mxu0
        %v422 = vadd.f32 0.0, %v421
        %v423 = vpop.f32.mrb[0].mxu0
        %v424 = vadd.f32 0.0, %v423
        %v425 = vpop.f32.mrb[0].mxu0
        %v426 = vadd.f32 0.0, %v425
        %427 = vdwg.mxu0
        %v428 = vpack.c.bf16 %v424, %v420
        %v430 = vunpack.c.l.b16 %v428
        %v431 = vunpack.c.h.b16 %v428
        %v432 = vpack.c.b16 %v430, %v430
        %v433 = vpack.c.b16 %v431, %v431
        %vm436 = vcmask 125952
        %437 = vst.msk [vmem:[%s276] sm:$0xf] %vm436, %v432
        %438 = vst.msk [vmem:[%s276 + $0x4] sm:$0xf] %vm436, %v433
        %439 = vrot.lane.b32.xlu0 %v432, 64
        %v440 = vpop.permute.xlu0 %439
        %441 = vrot.lane.b32.xlu0 %v433, 64
        %v442 = vpop.permute.xlu0 %441
        %445 = vst.msk [vmem:[%s282] sm:$0xf] %vm436, %v440
        %446 = vst.msk [vmem:[%s282 + $0x4] sm:$0xf] %vm436, %v442
        %v447 = vpack.c.bf16 %v426, %v422
        %v449 = vunpack.c.l.b16 %v447
        %v450 = vunpack.c.h.b16 %v447
        %v451 = vpack.c.b16 %v449, %v449
        %v452 = vpack.c.b16 %v450, %v450
        %455 = vst.msk [vmem:[%s288] sm:$0xf] %vm436, %v451
        %456 = vst.msk [vmem:[%s288 + $0x4] sm:$0xf] %vm436, %v452
        %457 = vrot.lane.b32.xlu0 %v432, 112
        %v458 = vpop.permute.xlu0 %457
        %459 = vrot.lane.b32.xlu0 %v433, 112
        %v460 = vpop.permute.xlu0 %459
        %s463 = scalar_lea.vmem %s276, 8 [#allocation6]
        %464 = vst.msk [vmem:[%s463] sm:$0xf] %vm436, %v458
        %465 = vst.msk [vmem:[%s463 + $0x4] sm:$0xf] %vm436, %v460
        %466 = vrot.lane.b32.xlu0 %v432, 48
        %v467 = vpop.permute.xlu0 %466
        %468 = vrot.lane.b32.xlu0 %v433, 48
        %v469 = vpop.permute.xlu0 %468
        %s472 = scalar_lea.vmem %s282, 8 [#allocation7]
        %473 = vst.msk [vmem:[%s472] sm:$0xf] %vm436, %v467
        %474 = vst.msk [vmem:[%s472 + $0x4] sm:$0xf] %vm436, %v469
        %475 = vrot.lane.b32.xlu0 %v451, 112
        %v476 = vpop.permute.xlu0 %475
        %477 = vrot.lane.b32.xlu0 %v452, 112
        %v478 = vpop.permute.xlu0 %477
        %s481 = scalar_lea.vmem %s288, 8 [#allocation8]
        %482 = vst.msk [vmem:[%s481] sm:$0xf] %vm436, %v476
        %483 = vst.msk [vmem:[%s481 + $0x4] sm:$0xf] %vm436, %v478
        %484 = vrot.lane.b32.xlu0 %v432, 96
        %v485 = vpop.permute.xlu0 %484
        %486 = vrot.lane.b32.xlu0 %v433, 96
        %v487 = vpop.permute.xlu0 %486
        %s490 = scalar_lea.vmem %s276, 16 [#allocation6]
        %491 = vst.msk [vmem:[%s490] sm:$0xf] %vm436, %v485
        %492 = vst.msk [vmem:[%s490 + $0x4] sm:$0xf] %vm436, %v487
        %493 = vrot.lane.b32.xlu0 %v432, 32
        %v494 = vpop.permute.xlu0 %493
        %495 = vrot.lane.b32.xlu0 %v433, 32
        %v496 = vpop.permute.xlu0 %495
        %s499 = scalar_lea.vmem %s282, 16 [#allocation7]
        %500 = vst.msk [vmem:[%s499] sm:$0xf] %vm436, %v494
        %501 = vst.msk [vmem:[%s499 + $0x4] sm:$0xf] %vm436, %v496
        %502 = vrot.lane.b32.xlu0 %v451, 96
        %v503 = vpop.permute.xlu0 %502
        %504 = vrot.lane.b32.xlu0 %v452, 96
        %v505 = vpop.permute.xlu0 %504
        %s508 = scalar_lea.vmem %s288, 16 [#allocation8]
        %509 = vst.msk [vmem:[%s508] sm:$0xf] %vm436, %v503
        %510 = vst.msk [vmem:[%s508 + $0x4] sm:$0xf] %vm436, %v505
        %511 = vrot.lane.b32.xlu0 %v432, 80
        %v512 = vpop.permute.xlu0 %511
        %513 = vrot.lane.b32.xlu0 %v433, 80
        %v514 = vpop.permute.xlu0 %513
        %s517 = scalar_lea.vmem %s276, 24 [#allocation6]
        %518 = vst.msk [vmem:[%s517] sm:$0xf] %vm436, %v512
        %519 = vst.msk [vmem:[%s517 + $0x4] sm:$0xf] %vm436, %v514
        %520 = vrot.lane.b32.xlu0 %v432, 16
        %v521 = vpop.permute.xlu0 %520
        %522 = vrot.lane.b32.xlu0 %v433, 16
        %v523 = vpop.permute.xlu0 %522
        %s526 = scalar_lea.vmem %s282, 24 [#allocation7]
        %527 = vst.msk [vmem:[%s526] sm:$0xf] %vm436, %v521
        %528 = vst.msk [vmem:[%s526 + $0x4] sm:$0xf] %vm436, %v523
        %529 = vrot.lane.b32.xlu0 %v451, 80
        %v530 = vpop.permute.xlu0 %529
        %531 = vrot.lane.b32.xlu0 %v452, 80
        %v532 = vpop.permute.xlu0 %531
        %s535 = scalar_lea.vmem %s288, 24 [#allocation8]
        %536 = vst.msk [vmem:[%s535] sm:$0xf] %vm436, %v530
        %537 = vst.msk [vmem:[%s535 + $0x4] sm:$0xf] %vm436, %v532
        %s538 = sand.u32 %s113, 1
        %s539 = sand.u32 %s113, 1
        %s540 = smul.addr %s539, 32
        %s541 = scalar_lea.vmem [#allocation6], %s540
        %s542 = sand.u32 %s141, 1
        %s543 = sand.u32 %s141, 1
        %s544 = smul.addr %s543, 32
        %s545 = scalar_lea.vmem [#allocation7], %s544
        %s546 = sand.u32 %s169, 1
        %s547 = sand.u32 %s169, 1
        %s548 = smul.addr %s547, 32
        %s549 = scalar_lea.vmem [#allocation8], %s548
        // Predicated region
        $region41: #{tpu_custom_call.1} parent=31 // pred_check
          %p550 = pneg %p123
        $region42: #{tpu_custom_call.1} parent=31 // pred_check_branch
          %552 = sbr.rel (%p550) target = $region44
        $region43: #{tpu_custom_call.1} parent=31 // pred_region
          %s553 = smul.u32 2, %s26
          %s554 = smul.addr %s25, 32
          %s555 = sadd.s32 %s553, %s554
          %s556 = smul.addr %s555, 4
          %s557 = scalar_lea.vmem %s3, %s556
          // Predicated region
          $region45: #{tpu_custom_call.1} parent=43 // pred_check
            _
          $region46: #{tpu_custom_call.1} parent=43 // pred_check_branch
            %559 = sbr.rel (0) target = $region48
          $region47: #{tpu_custom_call.1} parent=43 // pred_region
            // Predicated region
            $region49: #{tpu_custom_call.1} parent=47 // pred_check
              _
            $region50: #{tpu_custom_call.1} parent=47 // pred_check_branch
              %561 = sbr.rel target = $region52
            $region51: #{tpu_custom_call.1} parent=47 // pred_region
              // Predicated region
              $region64: #{tpu_custom_call.1} parent=51 // pred_check
                _
              $region65: #{tpu_custom_call.1} parent=51 // pred_check_branch
                %590 = sbr.rel (0) target = $region67
              $region66: #{tpu_custom_call.1} parent=51 // pred_region
                loop: start=0, step=1, limit=1
                $region68: #{tpu_custom_call.1} parent=66 // loop_pre_header
                  _
                $region69: #{tpu_custom_call.1} parent=66 // loop_header
                  %s592 = sphi 0, %s596
                  %p593 = scmp.ge.s32.totalorder %s592, 1
                  %s597 = sphi %s541, %s541
                  %s598 = sphi %s557, %s557
                $region70: #{tpu_custom_call.1} parent=66 // loop_header_branch
                  %595 = sbr.rel (%p593) target = $region74
                $region71: #{tpu_custom_call.1} parent=66 // loop_body
                  _
                $region72: #{tpu_custom_call.1} parent=66 // loop_footer
                  %s596 = sadd.s32 1, %s592
                $region73: #{tpu_custom_call.1} parent=66 // loop_footer_branch
                  %591 = sbr.rel target = $region69
                $region74: #{tpu_custom_call.1} parent=66 // loop_exit
                  _
                loop: start=0, step=1, limit=1
                $region75: #{tpu_custom_call.1} parent=66 // loop_pre_header
                  _
                $region76: #{tpu_custom_call.1} parent=66 // loop_header
                  %s601 = sphi 0, %s605
                  %p602 = scmp.ge.s32.totalorder %s601, 1
                  %s606 = sphi %s541, %s541
                  %s607 = sphi %s557, %s557
                $region77: #{tpu_custom_call.1} parent=66 // loop_header_branch
                  %604 = sbr.rel (%p602) target = $region81
                $region78: #{tpu_custom_call.1} parent=66 // loop_body
                  %v608 = vld [vmem:[%s606] sm:$0xf]
                  %609 = vst [vmem:[%s607] sm:$0xf] %v608
                  %v610 = vld [vmem:[%s606 + $0x4] sm:$0xf]
                  %611 = vst [vmem:[%s607 + $0x4] sm:$0xf] %v610
                  %v612 = vld [vmem:[%s606 + $0x8] sm:$0xf]
                  %613 = vst [vmem:[%s607 + $0x20] sm:$0xf] %v612
                  %v614 = vld [vmem:[%s606 + $0xc] sm:$0xf]
                  %615 = vst [vmem:[%s607 + $0x24] sm:$0xf] %v614
                  %v616 = vld [vmem:[%s606 + $0x10] sm:$0xf]
                  %617 = vst [vmem:[%s607 + $0x40] sm:$0xf] %v616
                  %v618 = vld [vmem:[%s606 + $0x14] sm:$0xf]
                  %619 = vst [vmem:[%s607 + $0x44] sm:$0xf] %v618
                  %v620 = vld [vmem:[%s606 + $0x18] sm:$0xf]
                  %621 = vst [vmem:[%s607 + $0x60] sm:$0xf] %v620
                  %v622 = vld [vmem:[%s606 + $0x1c] sm:$0xf]
                  %623 = vst [vmem:[%s607 + $0x64] sm:$0xf] %v622
                $region79: #{tpu_custom_call.1} parent=66 // loop_footer
                  %s605 = sadd.s32 1, %s601
                $region80: #{tpu_custom_call.1} parent=66 // loop_footer_branch
                  %600 = sbr.rel target = $region76
                $region81: #{tpu_custom_call.1} parent=66 // loop_exit
                  _
              $region67: #{tpu_custom_call.1} parent=51 // pred_fallthru
                _
            $region52: #{tpu_custom_call.1} parent=47 // pred_fallthru
              _
            // Predicated region
            $region53: #{tpu_custom_call.1} parent=47 // pred_check
              _
            $region54: #{tpu_custom_call.1} parent=47 // pred_check_branch
              %563 = sbr.rel (0) target = $region56
            $region55: #{tpu_custom_call.1} parent=47 // pred_region
              loop: start=0, step=1, limit=1
              $region57: #{tpu_custom_call.1} parent=55 // loop_pre_header
                _
              $region58: #{tpu_custom_call.1} parent=55 // loop_header
                %s566 = sphi 0, %s570
                %p567 = scmp.ge.s32.totalorder %s566, 1
                %s571 = sphi %s541, %s541
                %s572 = sphi %s557, %s557
              $region59: #{tpu_custom_call.1} parent=55 // loop_header_branch
                %569 = sbr.rel (%p567) target = $region63
              $region60: #{tpu_custom_call.1} parent=55 // loop_body
                %v573 = vld [vmem:[%s571] sm:$0xf]
                %574 = vst [vmem:[%s572] sm:$0xf] %v573
                %v575 = vld [vmem:[%s571 + $0x4] sm:$0xf]
                %576 = vst [vmem:[%s572 + $0x4] sm:$0xf] %v575
                %v577 = vld [vmem:[%s571 + $0x8] sm:$0xf]
                %578 = vst [vmem:[%s572 + $0x20] sm:$0xf] %v577
                %v579 = vld [vmem:[%s571 + $0xc] sm:$0xf]
                %580 = vst [vmem:[%s572 + $0x24] sm:$0xf] %v579
                %v581 = vld [vmem:[%s571 + $0x10] sm:$0xf]
                %582 = vst [vmem:[%s572 + $0x40] sm:$0xf] %v581
                %v583 = vld [vmem:[%s571 + $0x14] sm:$0xf]
                %584 = vst [vmem:[%s572 + $0x44] sm:$0xf] %v583
                %v585 = vld [vmem:[%s571 + $0x18] sm:$0xf]
                %586 = vst [vmem:[%s572 + $0x60] sm:$0xf] %v585
                %v587 = vld [vmem:[%s571 + $0x1c] sm:$0xf]
                %588 = vst [vmem:[%s572 + $0x64] sm:$0xf] %v587
              $region61: #{tpu_custom_call.1} parent=55 // loop_footer
                %s570 = sadd.s32 1, %s566
              $region62: #{tpu_custom_call.1} parent=55 // loop_footer_branch
                %565 = sbr.rel target = $region58
              $region63: #{tpu_custom_call.1} parent=55 // loop_exit
                _
            $region56: #{tpu_custom_call.1} parent=47 // pred_fallthru
              _
          $region48: #{tpu_custom_call.1} parent=43 // pred_fallthru
            _
          %624 = vnop
        $region44: #{tpu_custom_call.1} parent=31 // pred_fallthru
          _
        // Predicated region
        $region82: #{tpu_custom_call.1} parent=31 // pred_check
          %p625 = pneg %p151
        $region83: #{tpu_custom_call.1} parent=31 // pred_check_branch
          %627 = sbr.rel (%p625) target = $region85
        $region84: #{tpu_custom_call.1} parent=31 // pred_region
          %s628 = smul.u32 2, %s26
          %s629 = smul.addr %s25, 32
          %s630 = sadd.s32 %s628, %s629
          %s631 = smul.addr %s630, 4
          %s632 = scalar_lea.vmem %s4, %s631
          // Predicated region
          $region86: #{tpu_custom_call.1} parent=84 // pred_check
            _
          $region87: #{tpu_custom_call.1} parent=84 // pred_check_branch
            %634 = sbr.rel (0) target = $region89
          $region88: #{tpu_custom_call.1} parent=84 // pred_region
            // Predicated region
            $region90: #{tpu_custom_call.1} parent=88 // pred_check
              _
            $region91: #{tpu_custom_call.1} parent=88 // pred_check_branch
              %636 = sbr.rel target = $region93
            $region92: #{tpu_custom_call.1} parent=88 // pred_region
              // Predicated region
              $region105: #{tpu_custom_call.1} parent=92 // pred_check
                _
              $region106: #{tpu_custom_call.1} parent=92 // pred_check_branch
                %665 = sbr.rel (0) target = $region108
              $region107: #{tpu_custom_call.1} parent=92 // pred_region
                loop: start=0, step=1, limit=1
                $region109: #{tpu_custom_call.1} parent=107 // loop_pre_header
                  _
                $region110: #{tpu_custom_call.1} parent=107 // loop_header
                  %s667 = sphi 0, %s671
                  %p668 = scmp.ge.s32.totalorder %s667, 1
                  %s672 = sphi %s545, %s545
                  %s673 = sphi %s632, %s632
                $region111: #{tpu_custom_call.1} parent=107 // loop_header_branch
                  %670 = sbr.rel (%p668) target = $region115
                $region112: #{tpu_custom_call.1} parent=107 // loop_body
                  _
                $region113: #{tpu_custom_call.1} parent=107 // loop_footer
                  %s671 = sadd.s32 1, %s667
                $region114: #{tpu_custom_call.1} parent=107 // loop_footer_branch
                  %666 = sbr.rel target = $region110
                $region115: #{tpu_custom_call.1} parent=107 // loop_exit
                  _
                loop: start=0, step=1, limit=1
                $region116: #{tpu_custom_call.1} parent=107 // loop_pre_header
                  _
                $region117: #{tpu_custom_call.1} parent=107 // loop_header
                  %s676 = sphi 0, %s680
                  %p677 = scmp.ge.s32.totalorder %s676, 1
                  %s681 = sphi %s545, %s545
                  %s682 = sphi %s632, %s632
                $region118: #{tpu_custom_call.1} parent=107 // loop_header_branch
                  %679 = sbr.rel (%p677) target = $region122
                $region119: #{tpu_custom_call.1} parent=107 // loop_body
                  %v683 = vld [vmem:[%s681] sm:$0xf]
                  %684 = vst [vmem:[%s682] sm:$0xf] %v683
                  %v685 = vld [vmem:[%s681 + $0x4] sm:$0xf]
                  %686 = vst [vmem:[%s682 + $0x4] sm:$0xf] %v685
                  %v687 = vld [vmem:[%s681 + $0x8] sm:$0xf]
                  %688 = vst [vmem:[%s682 + $0x20] sm:$0xf] %v687
                  %v689 = vld [vmem:[%s681 + $0xc] sm:$0xf]
                  %690 = vst [vmem:[%s682 + $0x24] sm:$0xf] %v689
                  %v691 = vld [vmem:[%s681 + $0x10] sm:$0xf]
                  %692 = vst [vmem:[%s682 + $0x40] sm:$0xf] %v691
                  %v693 = vld [vmem:[%s681 + $0x14] sm:$0xf]
                  %694 = vst [vmem:[%s682 + $0x44] sm:$0xf] %v693
                  %v695 = vld [vmem:[%s681 + $0x18] sm:$0xf]
                  %696 = vst [vmem:[%s682 + $0x60] sm:$0xf] %v695
                  %v697 = vld [vmem:[%s681 + $0x1c] sm:$0xf]
                  %698 = vst [vmem:[%s682 + $0x64] sm:$0xf] %v697
                $region120: #{tpu_custom_call.1} parent=107 // loop_footer
                  %s680 = sadd.s32 1, %s676
                $region121: #{tpu_custom_call.1} parent=107 // loop_footer_branch
                  %675 = sbr.rel target = $region117
                $region122: #{tpu_custom_call.1} parent=107 // loop_exit
                  _
              $region108: #{tpu_custom_call.1} parent=92 // pred_fallthru
                _
            $region93: #{tpu_custom_call.1} parent=88 // pred_fallthru
              _
            // Predicated region
            $region94: #{tpu_custom_call.1} parent=88 // pred_check
              _
            $region95: #{tpu_custom_call.1} parent=88 // pred_check_branch
              %638 = sbr.rel (0) target = $region97
            $region96: #{tpu_custom_call.1} parent=88 // pred_region
              loop: start=0, step=1, limit=1
              $region98: #{tpu_custom_call.1} parent=96 // loop_pre_header
                _
              $region99: #{tpu_custom_call.1} parent=96 // loop_header
                %s641 = sphi 0, %s645
                %p642 = scmp.ge.s32.totalorder %s641, 1
                %s646 = sphi %s545, %s545
                %s647 = sphi %s632, %s632
              $region100: #{tpu_custom_call.1} parent=96 // loop_header_branch
                %644 = sbr.rel (%p642) target = $region104
              $region101: #{tpu_custom_call.1} parent=96 // loop_body
                %v648 = vld [vmem:[%s646] sm:$0xf]
                %649 = vst [vmem:[%s647] sm:$0xf] %v648
                %v650 = vld [vmem:[%s646 + $0x4] sm:$0xf]
                %651 = vst [vmem:[%s647 + $0x4] sm:$0xf] %v650
                %v652 = vld [vmem:[%s646 + $0x8] sm:$0xf]
                %653 = vst [vmem:[%s647 + $0x20] sm:$0xf] %v652
                %v654 = vld [vmem:[%s646 + $0xc] sm:$0xf]
                %655 = vst [vmem:[%s647 + $0x24] sm:$0xf] %v654
                %v656 = vld [vmem:[%s646 + $0x10] sm:$0xf]
                %657 = vst [vmem:[%s647 + $0x40] sm:$0xf] %v656
                %v658 = vld [vmem:[%s646 + $0x14] sm:$0xf]
                %659 = vst [vmem:[%s647 + $0x44] sm:$0xf] %v658
                %v660 = vld [vmem:[%s646 + $0x18] sm:$0xf]
                %661 = vst [vmem:[%s647 + $0x60] sm:$0xf] %v660
                %v662 = vld [vmem:[%s646 + $0x1c] sm:$0xf]
                %663 = vst [vmem:[%s647 + $0x64] sm:$0xf] %v662
              $region102: #{tpu_custom_call.1} parent=96 // loop_footer
                %s645 = sadd.s32 1, %s641
              $region103: #{tpu_custom_call.1} parent=96 // loop_footer_branch
                %640 = sbr.rel target = $region99
              $region104: #{tpu_custom_call.1} parent=96 // loop_exit
                _
            $region97: #{tpu_custom_call.1} parent=88 // pred_fallthru
              _
          $region89: #{tpu_custom_call.1} parent=84 // pred_fallthru
            _
          %699 = vnop
        $region85: #{tpu_custom_call.1} parent=31 // pred_fallthru
          _
        // Predicated region
        $region123: #{tpu_custom_call.1} parent=31 // pred_check
          %p700 = pneg %p179
        $region124: #{tpu_custom_call.1} parent=31 // pred_check_branch
          %702 = sbr.rel (%p700) target = $region126
        $region125: #{tpu_custom_call.1} parent=31 // pred_region
          %s703 = smul.u32 2, %s26
          %s704 = smul.addr %s25, 32
          %s705 = sadd.s32 %s703, %s704
          %s706 = smul.addr %s705, 4
          %s707 = scalar_lea.vmem %s5, %s706
          // Predicated region
          $region127: #{tpu_custom_call.1} parent=125 // pred_check
            _
          $region128: #{tpu_custom_call.1} parent=125 // pred_check_branch
            %709 = sbr.rel (0) target = $region130
          $region129: #{tpu_custom_call.1} parent=125 // pred_region
            // Predicated region
            $region131: #{tpu_custom_call.1} parent=129 // pred_check
              _
            $region132: #{tpu_custom_call.1} parent=129 // pred_check_branch
              %711 = sbr.rel target = $region134
            $region133: #{tpu_custom_call.1} parent=129 // pred_region
              // Predicated region
              $region146: #{tpu_custom_call.1} parent=133 // pred_check
                _
              $region147: #{tpu_custom_call.1} parent=133 // pred_check_branch
                %740 = sbr.rel (0) target = $region149
              $region148: #{tpu_custom_call.1} parent=133 // pred_region
                loop: start=0, step=1, limit=1
                $region150: #{tpu_custom_call.1} parent=148 // loop_pre_header
                  _
                $region151: #{tpu_custom_call.1} parent=148 // loop_header
                  %s742 = sphi 0, %s746
                  %p743 = scmp.ge.s32.totalorder %s742, 1
                  %s747 = sphi %s549, %s549
                  %s748 = sphi %s707, %s707
                $region152: #{tpu_custom_call.1} parent=148 // loop_header_branch
                  %745 = sbr.rel (%p743) target = $region156
                $region153: #{tpu_custom_call.1} parent=148 // loop_body
                  _
                $region154: #{tpu_custom_call.1} parent=148 // loop_footer
                  %s746 = sadd.s32 1, %s742
                $region155: #{tpu_custom_call.1} parent=148 // loop_footer_branch
                  %741 = sbr.rel target = $region151
                $region156: #{tpu_custom_call.1} parent=148 // loop_exit
                  _
                loop: start=0, step=1, limit=1
                $region157: #{tpu_custom_call.1} parent=148 // loop_pre_header
                  _
                $region158: #{tpu_custom_call.1} parent=148 // loop_header
                  %s751 = sphi 0, %s755
                  %p752 = scmp.ge.s32.totalorder %s751, 1
                  %s756 = sphi %s549, %s549
                  %s757 = sphi %s707, %s707
                $region159: #{tpu_custom_call.1} parent=148 // loop_header_branch
                  %754 = sbr.rel (%p752) target = $region163
                $region160: #{tpu_custom_call.1} parent=148 // loop_body
                  %v758 = vld [vmem:[%s756] sm:$0xf]
                  %759 = vst [vmem:[%s757] sm:$0xf] %v758
                  %v760 = vld [vmem:[%s756 + $0x4] sm:$0xf]
                  %761 = vst [vmem:[%s757 + $0x4] sm:$0xf] %v760
                  %v762 = vld [vmem:[%s756 + $0x8] sm:$0xf]
                  %763 = vst [vmem:[%s757 + $0x20] sm:$0xf] %v762
                  %v764 = vld [vmem:[%s756 + $0xc] sm:$0xf]
                  %765 = vst [vmem:[%s757 + $0x24] sm:$0xf] %v764
                  %v766 = vld [vmem:[%s756 + $0x10] sm:$0xf]
                  %767 = vst [vmem:[%s757 + $0x40] sm:$0xf] %v766
                  %v768 = vld [vmem:[%s756 + $0x14] sm:$0xf]
                  %769 = vst [vmem:[%s757 + $0x44] sm:$0xf] %v768
                  %v770 = vld [vmem:[%s756 + $0x18] sm:$0xf]
                  %771 = vst [vmem:[%s757 + $0x60] sm:$0xf] %v770
                  %v772 = vld [vmem:[%s756 + $0x1c] sm:$0xf]
                  %773 = vst [vmem:[%s757 + $0x64] sm:$0xf] %v772
                $region161: #{tpu_custom_call.1} parent=148 // loop_footer
                  %s755 = sadd.s32 1, %s751
                $region162: #{tpu_custom_call.1} parent=148 // loop_footer_branch
                  %750 = sbr.rel target = $region158
                $region163: #{tpu_custom_call.1} parent=148 // loop_exit
                  _
              $region149: #{tpu_custom_call.1} parent=133 // pred_fallthru
                _
            $region134: #{tpu_custom_call.1} parent=129 // pred_fallthru
              _
            // Predicated region
            $region135: #{tpu_custom_call.1} parent=129 // pred_check
              _
            $region136: #{tpu_custom_call.1} parent=129 // pred_check_branch
              %713 = sbr.rel (0) target = $region138
            $region137: #{tpu_custom_call.1} parent=129 // pred_region
              loop: start=0, step=1, limit=1
              $region139: #{tpu_custom_call.1} parent=137 // loop_pre_header
                _
              $region140: #{tpu_custom_call.1} parent=137 // loop_header
                %s716 = sphi 0, %s720
                %p717 = scmp.ge.s32.totalorder %s716, 1
                %s721 = sphi %s549, %s549
                %s722 = sphi %s707, %s707
              $region141: #{tpu_custom_call.1} parent=137 // loop_header_branch
                %719 = sbr.rel (%p717) target = $region145
              $region142: #{tpu_custom_call.1} parent=137 // loop_body
                %v723 = vld [vmem:[%s721] sm:$0xf]
                %724 = vst [vmem:[%s722] sm:$0xf] %v723
                %v725 = vld [vmem:[%s721 + $0x4] sm:$0xf]
                %726 = vst [vmem:[%s722 + $0x4] sm:$0xf] %v725
                %v727 = vld [vmem:[%s721 + $0x8] sm:$0xf]
                %728 = vst [vmem:[%s722 + $0x20] sm:$0xf] %v727
                %v729 = vld [vmem:[%s721 + $0xc] sm:$0xf]
                %730 = vst [vmem:[%s722 + $0x24] sm:$0xf] %v729
                %v731 = vld [vmem:[%s721 + $0x10] sm:$0xf]
                %732 = vst [vmem:[%s722 + $0x40] sm:$0xf] %v731
                %v733 = vld [vmem:[%s721 + $0x14] sm:$0xf]
                %734 = vst [vmem:[%s722 + $0x44] sm:$0xf] %v733
                %v735 = vld [vmem:[%s721 + $0x18] sm:$0xf]
                %736 = vst [vmem:[%s722 + $0x60] sm:$0xf] %v735
                %v737 = vld [vmem:[%s721 + $0x1c] sm:$0xf]
                %738 = vst [vmem:[%s722 + $0x64] sm:$0xf] %v737
              $region143: #{tpu_custom_call.1} parent=137 // loop_footer
                %s720 = sadd.s32 1, %s716
              $region144: #{tpu_custom_call.1} parent=137 // loop_footer_branch
                %715 = sbr.rel target = $region140
              $region145: #{tpu_custom_call.1} parent=137 // loop_exit
                _
            $region138: #{tpu_custom_call.1} parent=129 // pred_fallthru
              _
          $region130: #{tpu_custom_call.1} parent=125 // pred_fallthru
            _
          %774 = vnop
        $region126: #{tpu_custom_call.1} parent=31 // pred_fallthru
          _
      $region32: #{tpu_custom_call.1} parent=5 // pred_fallthru
        _
      %p775 = scmp.le.s32.totalorder 2, %s16
      // Predicated region
      $region164: #{tpu_custom_call.1} parent=5 // pred_check
        %p776 = pneg %p775
      $region165: #{tpu_custom_call.1} parent=5 // pred_check_branch
        %778 = sbr.rel (%p776) target = $region167
      $region166: #{tpu_custom_call.1} parent=5 // pred_region
        %s779 = ssub.s32 %s16, 2
        // Predicated region
        $region168: #{tpu_custom_call.1} parent=166 // pred_check
          %p780 = pneg %p129
        $region169: #{tpu_custom_call.1} parent=166 // pred_check_branch
          %782 = sbr.rel (%p780) target = $region171
        $region170: #{tpu_custom_call.1} parent=166 // pred_region
          %s783 = sand.u32 %s114, 1
          %s784 = sand.u32 %s114, 1
          %s785 = smul.addr %s784, 32
          %s786 = scalar_lea.vmem [#allocation6], %s785
        $region171: #{tpu_custom_call.1} parent=166 // pred_fallthru
          _
        // Predicated region
        $region172: #{tpu_custom_call.1} parent=166 // pred_check
          %p787 = pneg %p157
        $region173: #{tpu_custom_call.1} parent=166 // pred_check_branch
          %789 = sbr.rel (%p787) target = $region175
        $region174: #{tpu_custom_call.1} parent=166 // pred_region
          %s790 = sand.u32 %s142, 1
          %s791 = sand.u32 %s142, 1
          %s792 = smul.addr %s791, 32
          %s793 = scalar_lea.vmem [#allocation7], %s792
        $region175: #{tpu_custom_call.1} parent=166 // pred_fallthru
          _
        // Predicated region
        $region176: #{tpu_custom_call.1} parent=166 // pred_check
          %p794 = pneg %p185
        $region177: #{tpu_custom_call.1} parent=166 // pred_check_branch
          %796 = sbr.rel (%p794) target = $region179
        $region178: #{tpu_custom_call.1} parent=166 // pred_region
          %s797 = sand.u32 %s170, 1
          %s798 = sand.u32 %s170, 1
          %s799 = smul.addr %s798, 32
          %s800 = scalar_lea.vmem [#allocation8], %s799
        $region179: #{tpu_custom_call.1} parent=166 // pred_fallthru
          _
      $region167: #{tpu_custom_call.1} parent=5 // pred_fallthru
        _
    $region6: #{tpu_custom_call.1} parent=1 // loop_footer
      %s20 = sadd.s32 1, %s16
    $region7: #{tpu_custom_call.1} parent=1 // loop_footer_branch
      %15 = sbr.rel target = $region3
    $region8: #{tpu_custom_call.1} parent=1 // loop_exit
      _
    %801 = vsyncpa [#allocation3], 1
    %s802 = scalar_lea.sflag [#allocation3], 1
    %803 = vsyncpa %s802, 1
    %804 = vsyncpa [#allocation5], 1

</llo_original>
